<compile_context>
chip_gen: v6e
topology: v6e:2x2x1
jax: 0.10.0
libtpu: 0.0.40
codegen_flags: <defaults>
</compile_context>

<pallas_src>
import jax
import jax.numpy as jnp
from jax.experimental import pallas as pl
from jax.experimental.pallas import tpu as pltpu


LAMB = 0.85
LANE = 128
TARGET_BLOCK_BYTES = 4 * 1024 * 1024   # ~4 MiB per input per pipeline buffer
VMEM_LIMIT_BYTES = 32 * 1024 * 1024    # explicit: > v5e's 16 MiB default, < v7x physical


def _sublane_multiple(dtype):
    # f32 -> 8, bf16/f16 -> 16, int8/fp8 -> 32
    return {4: 8, 2: 16, 1: 32}.get(jnp.dtype(dtype).itemsize, 8)


def _num_parallel_splits():
    # Only v7x has 2 TensorCores per chip; a 2-way split on v5e/v6e is pure
    # overhead (duplicate tail block + always-on row masking).
    try:
        kind = jax.devices()[0].device_kind.lower()
    except Exception:
        return 1
    return 2 if "7" in kind else 1


def _make_kernel(block_rows, bps, need_row_mask):
    r8 = block_rows // 8

    def kernel(nrows_ref, o_ref, t_ref, acc_ref):
        c = pl.program_id(0)
        j = pl.program_id(1)

        @pl.when(j == 0)
        def _():
            acc_ref[...] = jnp.zeros_like(acc_ref)

        o = o_ref[...].astype(jnp.float32)
        t = t_ref[...].astype(jnp.float32)
        mask = jnp.logical_and(o >= 0.01, t >= 0.01)

        if need_row_mask:
            # Scalar-unit limit: rows at/after `limit` are past the true end
            # of the array (ragged last block, or clamped duplicate blocks
            # whose limit is <= 0).  Interior blocks see an all-true compare,
            # i.e. only ~2 extra VALU ops/elem in the steady state.
            limit = nrows_ref[0] - (c * bps + j) * block_rows
            row_id = jax.lax.broadcasted_iota(jnp.int32, (block_rows, LANE), 0)
            mask = jnp.logical_and(mask, row_id < limit)

        # Safe operands so log() never sees <= 0 (or OOB garbage) on masked
        # lanes.  Masked lanes give log(1.01) - log(1.01) == 0 exactly, so no
        # extra where() on g is needed.
        o_safe = jnp.where(mask, o, 1.0)
        t_safe = jnp.where(mask, t, 1.0)
        g = jnp.log(o_safe + 0.01) - jnp.log(t_safe + 0.01)
        mf = mask.astype(jnp.float32)

        # Fold (block_rows,128) -> (8,128) with pure VALU adds (axis 0 of the
        # (r8,8,128) view is the non-tiled major dim) and accumulate into the
        # resident fused output block: [0:8]=count, [8:16]=sum, [16:24]=sumsq.
        g3 = g.reshape(r8, 8, LANE)
        m3 = mf.reshape(r8, 8, LANE)
        acc_ref[0, 0:8, :] += jnp.sum(m3, axis=0)
        acc_ref[0, 8:16, :] += jnp.sum(g3, axis=0)
        acc_ref[0, 16:24, :] += jnp.sum(g3 * g3, axis=0)

    return kernel


def silog_loss(output, target, lamb=LAMB):
    assert output.shape == target.shape
    o = output.reshape(-1)
    t = target.reshape(-1)
    n = o.shape[0]

    sub = max(_sublane_multiple(o.dtype), _sublane_multiple(t.dtype))
    chunk = sub * LANE
    padded_n = ((n + chunk - 1) // chunk) * chunk
    if padded_n != n:
        # Pad value 0.0 < 0.01 -> masked out exactly like out-of-mask elems.
        o = jnp.pad(o, (0, padded_n - n))
        t = jnp.pad(t, (0, padded_n - n))

    rows = padded_n // LANE
    o2 = o.reshape(rows, LANE)
    t2 = t.reshape(rows, LANE)

    # Block size targets ~4 MiB per input per pipeline buffer; scale the row
    # count by dtype width so bf16/f16 inputs keep the same bytes per DMA.
    itemsize = max(jnp.dtype(o.dtype).itemsize, jnp.dtype(t.dtype).itemsize)
    max_rows = max(8, (TARGET_BLOCK_BYTES // (LANE * itemsize)) // 8 * 8)
    block_rows = rows if rows <= max_rows else max_rows

    nb = pl.cdiv(rows, block_rows)           # total row-blocks
    nsplit = max(1, min(_num_parallel_splits(), nb))
    bps = pl.cdiv(nb, nsplit)                # row-blocks per parallel split
    clamp_blocks = (bps * nsplit != nb)
    need_row_mask = (nb * block_rows != rows) or clamp_blocks

    def in_map(c, j, nrows_ref):
        blk = c * bps + j
        if clamp_blocks:
            blk = jnp.minimum(blk, nb - 1)   # duplicate tail blocks re-read the
        return (blk, 0)                      # last block; rows masked in-kernel

    def out_map(c, j, nrows_ref):
        return (c, 0, 0)

    kernel = _make_kernel(block_rows, bps, need_row_mask)

    acc = pl.pallas_call(
        kernel,
        out_shape=jax.ShapeDtypeStruct((nsplit, 24, LANE), jnp.float32),
        grid_spec=pltpu.PrefetchScalarGridSpec(
            num_scalar_prefetch=1,
            grid=(nsplit, bps),
            in_specs=[
                pl.BlockSpec((block_rows, LANE), in_map),
                pl.BlockSpec((block_rows, LANE), in_map),
            ],
            out_specs=pl.BlockSpec((1, 24, LANE), out_map),
        ),
        compiler_params=pltpu.CompilerParams(
            dimension_semantics=("parallel", "arbitrary"),
            vmem_limit_bytes=VMEM_LIMIT_BYTES,
        ),
    )(jnp.array([rows], dtype=jnp.int32), o2, t2)

    cnt = acc[:, 0:8, :]
    sg = acc[:, 8:16, :]
    sq = acc[:, 16:24, :]

    # Tiny scalar epilogue in plain JAX.
    n_valid = jnp.sum(cnt)
    sum_g = jnp.sum(sg)
    sum_g2 = jnp.sum(sq)
    mean = sum_g / n_valid
    # torch.var default is unbiased (divide by N-1).  Clamp tiny negative
    # round-off from the single-pass form so sqrt stays finite.
    # TODO(synk): single-pass variance can cancel badly when |mean| >> std;
    # use a shifted / compensated combine if that regime matters.
    var = (sum_g2 - sum_g * mean) / (n_valid - 1.0)
    var = jnp.maximum(var, 0.0)
    dg = var + (1.0 - lamb) * mean * mean
    return jnp.sqrt(dg)


def _reference_silog(output, target, lamb=LAMB):
    o = output.reshape(-1).astype(jnp.float32)
    t = target.reshape(-1).astype(jnp.float32)
    mask = jnp.logical_and(o >= 0.01, t >= 0.01)
    g = jnp.where(mask,
                  jnp.log(jnp.where(mask, o, 1.0) + 0.01)
                  - jnp.log(jnp.where(mask, t, 1.0) + 0.01),
                  0.0)
    n = jnp.sum(mask.astype(jnp.float32))
    mean = jnp.sum(g) / n
    var = jnp.sum(jnp.where(mask, (g - mean) ** 2, 0.0)) / (n - 1.0)
    return jnp.sqrt(var + (1.0 - lamb) * mean ** 2)


if __name__ == "__main__":
    key = jax.random.PRNGKey(0)
    k1, k2 = jax.random.split(key)
    # Depth-map-like inputs, NCHW [2, 4, 16, 16]; some values fall below the
    # 0.01 threshold so the masking path is exercised.
    output = jax.random.uniform(k1, (2, 4, 16, 16), dtype=jnp.float32,
                                minval=-0.1, maxval=5.0)
    target = jax.random.uniform(k2, (2, 4, 16, 16), dtype=jnp.float32,
                                minval=-0.1, maxval=5.0)

    loss = jax.jit(silog_loss)(output, target)
    jax.block_until_ready(loss)

    ref = _reference_silog(output, target)
    if not jnp.allclose(loss, ref, rtol=1e-4, atol=1e-5):
        raise AssertionError(f"mismatch: kernel={loss} ref={ref}")

    print("KERNEL_OK")
</pallas_src>

<mosaic_0001>
module attributes {stable_mosaic.version = 11 : i64} {
  func.func @kernel(%arg0: i32, %arg1: i32, %arg2: memref<1xi32, #tpu.memory_space<smem>>, %arg3: memref<16x128xf32, #tpu.memory_space<vmem>>, %arg4: memref<16x128xf32, #tpu.memory_space<vmem>>, %arg5: memref<1x24x128xf32, #tpu.memory_space<vmem>>) attributes {dimension_semantics = [#tpu.dimension_semantics<parallel>, #tpu.dimension_semantics<arbitrary>], iteration_bounds = array<i64: 1, 1>, scalar_prefetch = 1 : i64, scratch_operands = 0 : i64, tpu.core_type = #tpu.core_type<tc>, window_params = [{transform_indices = @transform_0, window_bounds = array<i64: 16, 128>}, {transform_indices = @transform_1, window_bounds = array<i64: 16, 128>}, {transform_indices = @transform_2, window_bounds = array<i64: 1, 24, 128>}]} {
    %c0_i32 = arith.constant 0 : i32
    %0 = arith.cmpi eq, %arg1, %c0_i32 : i32
    %1 = arith.extui %0 : i1 to i32
    %c0_i32_0 = arith.constant 0 : i32
    %2 = arith.cmpi ne, %1, %c0_i32_0 : i32
    scf.if %2 {
      %cst_28 = arith.constant 0.000000e+00 : f32
      %47 = vector.broadcast %cst_28 : f32 to vector<1x24x128xf32>
      %c0_29 = arith.constant 0 : index
      %c0_30 = arith.constant 0 : index
      %c0_31 = arith.constant 0 : index
      %48 = vector.load %arg5[%c0_29, %c0_30, %c0_31] : memref<1x24x128xf32, #tpu.memory_space<vmem>>, vector<1x24x128xf32>
      tpu.vector_store %arg5[%c0_29, %c0_30, %c0_31], %47 {strides = array<i32>} : memref<1x24x128xf32, #tpu.memory_space<vmem>>, vector<1x24x128xf32>,
    } else {
    }
    %c0 = arith.constant 0 : index
    %c0_1 = arith.constant 0 : index
    %3 = vector.load %arg3[%c0, %c0_1] : memref<16x128xf32, #tpu.memory_space<vmem>>, vector<16x128xf32>
    %c0_2 = arith.constant 0 : index
    %c0_3 = arith.constant 0 : index
    %4 = vector.load %arg4[%c0_2, %c0_3] : memref<16x128xf32, #tpu.memory_space<vmem>>, vector<16x128xf32>
    %cst = arith.constant 0.00999999977 : f32
    %5 = vector.broadcast %cst : f32 to vector<16x128xf32>
    %6 = arith.cmpf oge, %3, %5 : vector<16x128xf32>
    %cst_4 = arith.constant 0.00999999977 : f32
    %7 = vector.broadcast %cst_4 : f32 to vector<16x128xf32>
    %8 = arith.cmpf oge, %4, %7 : vector<16x128xf32>
    %9 = arith.andi %6, %8 : vector<16x128xi1>
    %cst_5 = arith.constant 1.000000e+00 : f32
    %10 = vector.broadcast %cst_5 : f32 to vector<16x128xf32>
    %11 = arith.select %9, %3, %10 : vector<16x128xi1>, vector<16x128xf32>
    %cst_6 = arith.constant 1.000000e+00 : f32
    %12 = vector.broadcast %cst_6 : f32 to vector<16x128xf32>
    %13 = arith.select %9, %4, %12 : vector<16x128xi1>, vector<16x128xf32>
    %cst_7 = arith.constant 0.00999999977 : f32
    %14 = vector.broadcast %cst_7 : f32 to vector<16x128xf32>
    %15 = arith.addf %11, %14 : vector<16x128xf32>
    %16 = math.log %15 : vector<16x128xf32>
    %cst_8 = arith.constant 0.00999999977 : f32
    %17 = vector.broadcast %cst_8 : f32 to vector<16x128xf32>
    %18 = arith.addf %13, %17 : vector<16x128xf32>
    %19 = math.log %18 : vector<16x128xf32>
    %20 = arith.subf %16, %19 : vector<16x128xf32>
    %21 = arith.extui %9 : vector<16x128xi1> to vector<16x128xi32>
    %22 = arith.sitofp %21 : vector<16x128xi32> to vector<16x128xf32>
    %23 = vector.shape_cast %20 : vector<16x128xf32> to vector<2x8x128xf32>
    %24 = vector.shape_cast %22 : vector<16x128xf32> to vector<2x8x128xf32>
    %c0_9 = arith.constant 0 : index
    %c0_10 = arith.constant 0 : index
    %c0_11 = arith.constant 0 : index
    %25 = vector.load %arg5[%c0_9, %c0_10, %c0_11] : memref<1x24x128xf32, #tpu.memory_space<vmem>>, vector<1x8x128xf32>
    %26 = vector.shape_cast %25 : vector<1x8x128xf32> to vector<8x128xf32>
    %cst_12 = arith.constant dense<0.000000e+00> : vector<8x128xf32>
    %27 = vector.multi_reduction <add>, %24, %cst_12 [0] : vector<2x8x128xf32> to vector<8x128xf32>
    %28 = arith.addf %26, %27 : vector<8x128xf32>
    %c0_13 = arith.constant 0 : index
    %c0_14 = arith.constant 0 : index
    %c0_15 = arith.constant 0 : index
    %29 = vector.load %arg5[%c0_13, %c0_14, %c0_15] : memref<1x24x128xf32, #tpu.memory_space<vmem>>, vector<1x8x128xf32>
    %30 = vector.shape_cast %29 : vector<1x8x128xf32> to vector<8x128xf32>
    %31 = vector.shape_cast %28 : vector<8x128xf32> to vector<1x8x128xf32>
    tpu.vector_store %arg5[%c0_13, %c0_14, %c0_15], %31 {strides = array<i32>} : memref<1x24x128xf32, #tpu.memory_space<vmem>>, vector<1x8x128xf32>,
    %c0_16 = arith.constant 0 : index
    %c8 = arith.constant 8 : index
    %c0_17 = arith.constant 0 : index
    %32 = vector.load %arg5[%c0_16, %c8, %c0_17] : memref<1x24x128xf32, #tpu.memory_space<vmem>>, vector<1x8x128xf32>
    %33 = vector.shape_cast %32 : vector<1x8x128xf32> to vector<8x128xf32>
    %cst_18 = arith.constant dense<0.000000e+00> : vector<8x128xf32>
    %34 = vector.multi_reduction <add>, %23, %cst_18 [0] : vector<2x8x128xf32> to vector<8x128xf32>
    %35 = arith.addf %33, %34 : vector<8x128xf32>
    %c0_19 = arith.constant 0 : index
    %c8_20 = arith.constant 8 : index
    %c0_21 = arith.constant 0 : index
    %36 = vector.load %arg5[%c0_19, %c8_20, %c0_21] : memref<1x24x128xf32, #tpu.memory_space<vmem>>, vector<1x8x128xf32>
    %37 = vector.shape_cast %36 : vector<1x8x128xf32> to vector<8x128xf32>
    %38 = vector.shape_cast %35 : vector<8x128xf32> to vector<1x8x128xf32>
    tpu.vector_store %arg5[%c0_19, %c8_20, %c0_21], %38 {strides = array<i32>} : memref<1x24x128xf32, #tpu.memory_space<vmem>>, vector<1x8x128xf32>,
    %c0_22 = arith.constant 0 : index
    %c16 = arith.constant 16 : index
    %c0_23 = arith.constant 0 : index
    %39 = vector.load %arg5[%c0_22, %c16, %c0_23] : memref<1x24x128xf32, #tpu.memory_space<vmem>>, vector<1x8x128xf32>
    %40 = vector.shape_cast %39 : vector<1x8x128xf32> to vector<8x128xf32>
    %41 = arith.mulf %23, %23 : vector<2x8x128xf32>
    %cst_24 = arith.constant dense<0.000000e+00> : vector<8x128xf32>
    %42 = vector.multi_reduction <add>, %41, %cst_24 [0] : vector<2x8x128xf32> to vector<8x128xf32>
    %43 = arith.addf %40, %42 : vector<8x128xf32>
    %c0_25 = arith.constant 0 : index
    %c16_26 = arith.constant 16 : index
    %c0_27 = arith.constant 0 : index
    %44 = vector.load %arg5[%c0_25, %c16_26, %c0_27] : memref<1x24x128xf32, #tpu.memory_space<vmem>>, vector<1x8x128xf32>
    %45 = vector.shape_cast %44 : vector<1x8x128xf32> to vector<8x128xf32>
    %46 = vector.shape_cast %43 : vector<8x128xf32> to vector<1x8x128xf32>
    tpu.vector_store %arg5[%c0_25, %c16_26, %c0_27], %46 {strides = array<i32>} : memref<1x24x128xf32, #tpu.memory_space<vmem>>, vector<1x8x128xf32>,
    return
  }
  func.func @transform_0(%arg0: i32, %arg1: i32, %arg2: memref<1xi32, #tpu.memory_space<smem>>) -> (i32, i32) {
    %c1_i32 = arith.constant 1 : i32
    %0 = arith.muli %arg0, %c1_i32 : i32
    %1 = arith.addi %0, %arg1 : i32
    %c0_i32 = arith.constant 0 : i32
    %c0_i32_0 = arith.constant 0 : i32
    return %1, %c0_i32 : i32, i32
  }
  func.func @transform_1(%arg0: i32, %arg1: i32, %arg2: memref<1xi32, #tpu.memory_space<smem>>) -> (i32, i32) {
    %c1_i32 = arith.constant 1 : i32
    %0 = arith.muli %arg0, %c1_i32 : i32
    %1 = arith.addi %0, %arg1 : i32
    %c0_i32 = arith.constant 0 : i32
    %c0_i32_0 = arith.constant 0 : i32
    return %1, %c0_i32 : i32, i32
  }
  func.func @transform_2(%arg0: i32, %arg1: i32, %arg2: memref<1xi32, #tpu.memory_space<smem>>) -> (i32, i32, i32) {
    %c0_i32 = arith.constant 0 : i32
    %c0_i32_0 = arith.constant 0 : i32
    %c0_i32_1 = arith.constant 0 : i32
    return %arg0, %c0_i32, %c0_i32_0 : i32, i32, i32
  }
}

</mosaic_0001>

<llo_original>
// kernel: silog_loss.1
$region0: #{silog_loss.1}
  #allocation0 [shape = 'u32[]', space=smem, size = 0x4, offset = 0x4, fixed_abs, tag = 'smem constant byte address 0x4 - core index']
  #allocation1 [shape = 'u32[144,128]{1,0:T(1,128)}', space=vmem, size = 0x12000, scoped, tag = 'internal scratch']
  #allocation2 [shape = 's32[1]{0}', space=sflag, size = 0x4, scoped, tag = 'scoped memory for silog_loss.1']
  #allocation3 [shape = 's32[1]{0:T(128)S(6)}', space=smem, size = 0x200, scoped, tag = 'prefetched SMEM operand 0']
  %s0 = inlined_call_operand.<no memory space> [shape: s32[1], index: 0, kind: input, shape index: {}]
  %s1 = inlined_call_operand.vmem [shape: f32[16,128], index: 1, kind: input, shape index: {}]
  %s2 = inlined_call_operand.vmem [shape: f32[16,128], index: 2, kind: input, shape index: {}]
  %s3 = inlined_call_operand.vmem [shape: f32[1,24,128], index: 3, kind: output, shape index: {}]
  %s4 = sld [smem:[#allocation0]]
  $region22: #{silog_loss.1} parent=0
    _
  %s6 = ssub.s32 1, %s4
  %s7 = scalar_select 0, %s6, %s4
  %8 = sst [smem:[#allocation3]] %s0
  // Predicated region
  $region2: #{silog_loss.1} parent=0 // pred_check
    _
  $region3: #{silog_loss.1} parent=0 // pred_check_branch
    %10 = sbr.rel (0) target = $region5
  $region4: #{silog_loss.1} parent=0 // pred_region
    %s11 = sadd.s32 0, 0
    %s12 = smul.u32 2, %s11
    %p13 = scmp.lt.s32.totalorder %s12, 1
    %s14 = scalar_select %p13, %s12, 1
    %s15 = smul.addr %s14, 8
    %s16 = scalar_lea.vmem %s1, %s15
    %s17 = sadd.s32 0, 0
    %s18 = smul.u32 2, %s17
  $region5: #{silog_loss.1} parent=0 // pred_fallthru
    _
  // Predicated region
  $region6: #{silog_loss.1} parent=0 // pred_check
    _
  $region7: #{silog_loss.1} parent=0 // pred_check_branch
    %20 = sbr.rel (0) target = $region9
  $region8: #{silog_loss.1} parent=0 // pred_region
    %s21 = sadd.s32 0, 0
    %s22 = smul.u32 2, %s21
    %p23 = scmp.lt.s32.totalorder %s22, 1
    %s24 = scalar_select %p23, %s22, 1
    %s25 = smul.addr %s24, 8
    %s26 = scalar_lea.vmem %s2, %s25
    %s27 = sadd.s32 0, 0
    %s28 = smul.u32 2, %s27
  $region9: #{silog_loss.1} parent=0 // pred_fallthru
    _
  %s29 = sadd.s32 0, 0
  %s30 = smul.u32 2, %s29
  %p31 = scmp.lt.s32.totalorder %s30, 1
  %s32 = scalar_select %p31, %s30, 1
  %s33 = smul.addr %s32, 8
  %s34 = scalar_lea.vmem %s1, %s33
  %s35 = sadd.s32 0, 0
  %s36 = smul.u32 2, %s35
  %p37 = scmp.lt.s32.totalorder %s36, 1
  %s38 = scalar_select %p37, %s36, 1
  %s39 = smul.addr %s38, 8
  %s40 = scalar_lea.vmem %s2, %s39
  %s41 = sadd.s32 0, 0
  %s42 = smul.u32 2, %s41
  %p43 = scmp.lt.s32.totalorder %s42, 1
  %s44 = scalar_select %p43, %s42, 1
  %s45 = smul.addr %s44, 8
  %s46 = scalar_lea.vmem %s1, %s45
  %s47 = sadd.s32 0, 0
  %s48 = smul.u32 2, %s47
  %s49 = sadd.s32 0, 0
  %s50 = smul.u32 2, %s49
  %p51 = scmp.lt.s32.totalorder %s50, 1
  %s52 = scalar_select %p51, %s50, 1
  %s53 = smul.addr %s52, 8
  %s54 = scalar_lea.vmem %s2, %s53
  %s55 = sadd.s32 0, 0
  %s56 = smul.u32 2, %s55
  %p57 = scmp.eq.s32.totalorder 0, 0
  // Predicated region
  $region10: #{silog_loss.1} parent=0 // pred_check
    %p58 = pneg %p57
  $region11: #{silog_loss.1} parent=0 // pred_check_branch
    %60 = sbr.rel (%p58) target = $region13
  $region12: #{silog_loss.1} parent=0 // pred_region
    %61 = vst [vmem:[%s3] sm:$0xff] 0.0
    %62 = vst [vmem:[%s3 + $0x8] sm:$0xff] 0.0
    %63 = vst [vmem:[%s3 + $0x10] sm:$0xff] 0.0
  $region13: #{silog_loss.1} parent=0 // pred_fallthru
    _
  %v64 = vld [vmem:[%s46] sm:$0xff]
  %v65 = vld [vmem:[%s46 + $0x8] sm:$0xff]
  %v66 = vld [vmem:[%s54] sm:$0xff]
  %v67 = vld [vmem:[%s54 + $0x8] sm:$0xff]
  %vm68 = vcmp.ge.f32.partialorder %v64, 0.01
  %vm69 = vcmp.ge.f32.partialorder %v65, 0.01
  %vm70 = vcmp.ge.f32.partialorder %v66, 0.01
  %vm71 = vcmp.ge.f32.partialorder %v67, 0.01
  %vm72 = vmand %vm68, %vm70
  %vm73 = vmand %vm69, %vm71
  %v74 = vsel %vm72, %v64, 1.0
  %v75 = vsel %vm73, %v65, 1.0
  %v76 = vsel %vm72, %v66, 1.0
  %v77 = vsel %vm73, %v67, 1.0
  %v78 = vadd.f32 %v74, 0.01
  %v79 = vadd.f32 %v75, 0.01
  %v80 = vlog2.pop %v78
  %v81 = vmul.f32 %v80, 0.6931472
  %v82 = vlog2.pop %v79
  %v83 = vmul.f32 %v82, 0.6931472
  %v84 = vadd.f32 %v76, 0.01
  %v85 = vadd.f32 %v77, 0.01
  %v86 = vlog2.pop %v84
  %v87 = vmul.f32 %v86, 0.6931472
  %v88 = vlog2.pop %v85
  %v89 = vmul.f32 %v88, 0.6931472
  %v90 = vsub.f32 %v81, %v87
  %v91 = vsub.f32 %v83, %v89
  %v92 = vsel %vm72, 1, 0
  %v93 = vsel %vm73, 1, 0
  %v94 = vcvt.s32.f32 %v92
  %v95 = vcvt.s32.f32 %v93
  %v96 = vld [vmem:[%s3] sm:$0xff]
  %v97 = vadd.f32 %v94, %v95
  %v98 = vadd.f32 %v96, %v97
  %99 = vst [vmem:[%s3] sm:$0xff] %v98
  %v100 = vld [vmem:[%s3 + $0x8] sm:$0xff]
  %v101 = vadd.f32 %v90, %v91
  %v102 = vadd.f32 %v100, %v101
  %103 = vst [vmem:[%s3 + $0x8] sm:$0xff] %v102
  %v104 = vld [vmem:[%s3 + $0x10] sm:$0xff]
  %v105 = vmul.f32 %v90, %v90
  %v106 = vmul.f32 %v91, %v91
  %v107 = vadd.f32 %v105, %v106
  %v108 = vadd.f32 %v104, %v107
  %109 = vst [vmem:[%s3 + $0x10] sm:$0xff] %v108
  // Predicated region
  $region14: #{silog_loss.1} parent=0 // pred_check
    _
  $region15: #{silog_loss.1} parent=0 // pred_check_branch
    %111 = sbr.rel (0) target = $region17
  $region16: #{silog_loss.1} parent=0 // pred_region
    _
  $region17: #{silog_loss.1} parent=0 // pred_fallthru
    _
  // Predicated region
  $region18: #{silog_loss.1} parent=0 // pred_check
    _
  $region19: #{silog_loss.1} parent=0 // pred_check_branch
    %113 = sbr.rel (0) target = $region21
  $region20: #{silog_loss.1} parent=0 // pred_region
    _
  $region21: #{silog_loss.1} parent=0 // pred_fallthru
    _

</llo_original>
